<compile_context>
chip_gen: v5e
topology: v5e:2x2
jax: 0.10.0
libtpu: 0.0.40
codegen_flags: <defaults>
</compile_context>

<pallas_src>
import inspect
import math

import jax
import jax.numpy as jnp
from jax import lax
from jax.experimental import pallas as pl
from jax.experimental.pallas import tpu as pltpu

_VMEM_TILE_BUDGET = 20 * 1024 * 1024   # steady-state tile footprint cap (fits v7x 64 MiB/TC)
_VMEM_LIMIT_BYTES = 32 * 1024 * 1024   # raise v5e's 16 MiB scoped default; == v6e/v7x default


def _leaky_relu_gain(negative_slope: float) -> float:
    # torch.nn.init.calculate_gain('leaky_relu', slope)
    return math.sqrt(2.0 / (1.0 + negative_slope ** 2))


def _round_up(v: int, m: int) -> int:
    return (v + m - 1) // m * m


def _sublane(dtype) -> int:
    # Minimum second-minor tile by element width: fp32->8, bf16->16, int8/fp8->32.
    return {4: 8, 2: 16, 1: 32}.get(jnp.dtype(dtype).itemsize, 8)


def _pick_divisor_tile(dim: int, max_tile: int) -> int:
    """Largest multiple of 128 that divides `dim` (dim % 128 == 0) and is <= max_tile."""
    start = max(128, (min(max_tile, dim) // 128) * 128)
    for t in range(start, 127, -128):
        if dim % t == 0:
            return t
    return 128


def _pick_tm(M: int, sublane: int, max_tm: int) -> int:
    """Tile for the batch axis: full (aligned) M when small, else minimize padding waste."""
    m_aligned = _round_up(M, sublane)
    if m_aligned <= max_tm:
        return m_aligned
    best = None
    for t in (512, 384, 256, 128):
        if t > max_tm:
            continue
        key = (_round_up(M, t) - M, -t)   # minimize waste, prefer larger tile
        if best is None or key < best[0]:
            best = (key, t)
    return best[1] if best else _round_up(min(max_tm, m_aligned), sublane)


def _supports_buffered() -> bool:
    try:
        return (hasattr(pl, "Buffered")
                and "pipeline_mode" in inspect.signature(pl.BlockSpec).parameters)
    except Exception:
        return False


def _tile_footprint(tm, tn, tk, x_item, w_item, o_item, use_scratch, w_bufs=2):
    return (2 * tm * tk * x_item            # x tiles (double-buffered)
            + w_bufs * tn * tk * w_item     # weight tiles
            + 2 * tm * tn * o_item          # output tiles
            + (tm * tn * 4 if use_scratch else 0)
            + 2 * 2 * tn * 4)               # scale + bias tiles


def _make_kernel(negative_slope, use_scratch):
    """Kernel body with static activation / accumulator config baked in."""

    if use_scratch:
        # Narrow output dtype (e.g. bf16): accumulate in a fp32 VMEM scratch.
        def kernel(x_ref, w_ref, s_ref, b_ref, o_ref, acc_ref):
            k = pl.program_id(2)

            @pl.when(k == 0)
            def _():
                acc_ref[...] = jnp.zeros_like(acc_ref)

            acc_ref[...] += lax.dot_general(
                x_ref[...], w_ref[...],
                dimension_numbers=(((1,), (1,)), ((), ())),
                preferred_element_type=jnp.float32)

            @pl.when(k == pl.num_programs(2) - 1)
            def _():
                out = acc_ref[...] * s_ref[...] + b_ref[...]
                if negative_slope is not None:
                    out = jnp.where(out >= 0, out, out * negative_slope)
                o_ref[...] = out.astype(o_ref.dtype)

        return kernel

    # fp32 output: the output block (revisited across k) is the accumulator —
    # saves tm*tn*4 bytes of VMEM and one tile copy per output block.
    def kernel(x_ref, w_ref, s_ref, b_ref, o_ref):
        k = pl.program_id(2)

        @pl.when(k == 0)
        def _():
            o_ref[...] = jnp.zeros_like(o_ref)

        o_ref[...] += lax.dot_general(
            x_ref[...], w_ref[...],
            dimension_numbers=(((1,), (1,)), ((), ())),
            preferred_element_type=jnp.float32)

        @pl.when(k == pl.num_programs(2) - 1)
        def _():
            out = o_ref[...] * s_ref[...] + b_ref[...]
            if negative_slope is not None:
                out = jnp.where(out >= 0, out, out * negative_slope)
            o_ref[...] = out

    return kernel


def linear_elr_forward(x, weight_p, scale_p, bias_p, N, K, *,
                       act_negative_slope=None,
                       max_tm=512, max_tn=512, max_tk=None):
    """Pallas-backed LinearELR.forward.

    x: [M, K]; weight_p: [Np, Kp] pre-padded (128-aligned) weight in its native
    [out, in] layout; scale_p/bias_p: [1, Np] fp32 (scale already folds
    weightgain and, for 'demod', 1/||w_row||).  Returns [M, N].
    """
    M, Kx = x.shape
    assert Kx == K, "in_features mismatch"
    Np, Kp = weight_p.shape

    compute_dtype = weight_p.dtype
    out_dtype = x.dtype
    x_item = jnp.dtype(compute_dtype).itemsize
    w_item = x_item
    o_item = jnp.dtype(out_dtype).itemsize
    if max_tk is None:
        max_tk = 4096 // x_item            # 1024 fp32, 2048 bf16, 4096 fp8/int8

    use_scratch = jnp.dtype(out_dtype) != jnp.dtype(jnp.float32)

    # ---- tile selection ------------------------------------------------
    sub = _sublane(compute_dtype)
    tm = _pick_tm(M, sub, max_tm)
    Mp = _round_up(M, tm)
    tn = _pick_divisor_tile(Np, max_tn)
    tk = _pick_divisor_tile(Kp, max_tk)

    # v7x has 2 TensorCores: guarantee >=2 blocks on a "parallel" axis in the
    # common small-batch (single M block) case.
    if Mp // tm == 1 and Np // tn < 2 and Np >= 256:
        tn = _pick_divisor_tile(Np, Np // 2)

    # Cap the double-buffered VMEM footprint (safe on v7x 64 MiB / v5e defaults).
    while (_tile_footprint(tm, tn, tk, x_item, w_item, o_item, use_scratch)
           > _VMEM_TILE_BUDGET and tk > 128):
        tk = _pick_divisor_tile(Kp, tk - 128)
    while (_tile_footprint(tm, tn, tk, x_item, w_item, o_item, use_scratch)
           > _VMEM_TILE_BUDGET and tn > 128):
        tn = _pick_divisor_tile(Np, tn - 128)

    grid = (Mp // tm, Np // tn, Kp // tk)
    n_steps = grid[0] * grid[1] * grid[2]

    # Weight-streaming regime: deeper buffering on the streamed weight operand.
    w_bufs = 2
    if (grid[0] == 1 and n_steps >= 3 and _supports_buffered()
            and _tile_footprint(tm, tn, tk, x_item, w_item, o_item,
                                use_scratch, 3) <= _VMEM_TILE_BUDGET):
        w_bufs = 3

    # ---- pad only the (small) activation; params are pre-padded once ----
    x_c = x.astype(compute_dtype)
    if Mp != M or Kp != K:
        x_c = jnp.pad(x_c, ((0, Mp - M), (0, Kp - K)))

    w_index = lambda i, j, k: (j, k)
    if w_bufs == 3:
        w_spec = pl.BlockSpec((tn, tk), w_index, pipeline_mode=pl.Buffered(3))
    else:
        w_spec = pl.BlockSpec((tn, tk), w_index)

    in_specs = [
        pl.BlockSpec((tm, tk), lambda i, j, k: (i, k)),   # x tile
        w_spec,                                           # weight tile [N, K]
        pl.BlockSpec((1, tn), lambda i, j, k: (0, j)),    # per-channel scale
        pl.BlockSpec((1, tn), lambda i, j, k: (0, j)),    # bias
    ]
    scratch = [pltpu.VMEM((tm, tn), jnp.float32)] if use_scratch else []

    # Realistic byte counts: operands are re-read once per block of the other
    # parallel axis; output written once.
    bytes_accessed = int(
        Mp * Kp * grid[1] * x_item
        + Np * Kp * grid[0] * w_item
        + Mp * Np * o_item
        + 2 * Np * 4 * grid[0])

    out_p = pl.pallas_call(
        _make_kernel(act_negative_slope, use_scratch),
        out_shape=jax.ShapeDtypeStruct((Mp, Np), out_dtype),
        grid_spec=pltpu.PrefetchScalarGridSpec(
            num_scalar_prefetch=0,
            grid=grid,
            in_specs=in_specs,
            out_specs=pl.BlockSpec((tm, tn), lambda i, j, k: (i, j)),
            scratch_shapes=scratch,
        ),
        compiler_params=pltpu.CompilerParams(
            dimension_semantics=("parallel", "parallel", "arbitrary"),
            vmem_limit_bytes=_VMEM_LIMIT_BYTES),
        cost_estimate=pl.CostEstimate(
            flops=2 * Mp * Np * Kp,
            transcendentals=0,
            bytes_accessed=bytes_accessed),
    )(x_c, weight_p, scale_p, bias_p)

    return out_p[:M, :N]


class LinearELRJax:
    """Config/parameter holder mirroring the PyTorch module.

    Pads the weight/bias/scale and computes the 'demod' row norm ONCE at
    parameter-set time (weights are static at inference), so the per-call path
    never re-pads or re-reads the full weight outside the kernel.
    """

    def __init__(self, inch, outch, key, lrmult=1.0, norm=None,
                 act_negative_slope=None, param_dtype=jnp.float32):
        if act_negative_slope is not None:
            actgain = _leaky_relu_gain(act_negative_slope)
        else:
            actgain = 1.0   # torch module's try/except falls back to 1.0
        initgain = 1.0 / math.sqrt(inch)

        self.inch, self.outch = inch, outch
        self.norm = norm
        self.act_negative_slope = act_negative_slope
        self.param_dtype = jnp.dtype(param_dtype)
        # TODO(synk): add an fp8 weight path (with the quant scale folded into
        # scale_p) to exploit the v7x fp8 MXU; not portable to v5e/v6e.

        self.weightgain = actgain
        if norm is None:
            self.weightgain = self.weightgain * initgain * lrmult

        # torch.randn(outch, inch) / lrmult  -> deterministic synthetic init
        weight = jax.random.normal(key, (outch, inch), jnp.float32) / lrmult
        bias = jnp.zeros((outch,), jnp.float32)
        self.set_params(weight, bias)

    def set_params(self, weight, bias):
        # NOTE: call again whenever the weight changes (e.g. after a training
        # step) so the cached padded buffers / demod scale stay in sync.
        N, K = weight.shape
        Np, Kp = _round_up(N, 128), _round_up(K, 128)

        if self.norm == "demod":
            # Fold F.normalize's row norm into a per-channel post-matmul scale:
            #   x @ (w/||w||).T == (x @ w.T) * (1/||w||)[None, :]
            w32 = weight.astype(jnp.float32)
            row_norm = jnp.sqrt(jnp.sum(w32 * w32, axis=1))
            scale = self.weightgain / jnp.maximum(row_norm, 1e-12)
        else:
            scale = jnp.full((N,), self.weightgain, jnp.float32)

        self.weight = weight
        self.bias = bias
        w_c = weight.astype(self.param_dtype)
        self.weight_p = jnp.pad(w_c, ((0, Np - N), (0, Kp - K)))
        self.scale_p = jnp.pad(scale.astype(jnp.float32), (0, Np - N)).reshape(1, Np)
        self.bias_p = jnp.pad(bias.astype(jnp.float32), (0, Np - N)).reshape(1, Np)

    def __call__(self, x, **tile_kwargs):
        return linear_elr_forward(
            x, self.weight_p, self.scale_p, self.bias_p,
            self.outch, self.inch,
            act_negative_slope=self.act_negative_slope,
            **tile_kwargs)


def _reference(x, weight, bias, weightgain, norm, negative_slope):
    w = weight.astype(jnp.float32)
    xf = x.astype(jnp.float32)
    if norm == "demod":
        w = w / jnp.maximum(
            jnp.sqrt(jnp.sum(w * w, axis=1, keepdims=True)), 1e-12)
    out = xf @ (w * weightgain).T + bias.astype(jnp.float32)[None]
    if negative_slope is not None:
        out = jnp.where(out >= 0, out, out * negative_slope)
    return out


if __name__ == "__main__":
    key = jax.random.PRNGKey(0)
    k_x, k_x3, k_x4, k_m1, k_m2, k_m3, k_m4 = jax.random.split(key, 7)

    batch, inch, outch = 8, 32, 64
    x = jax.random.normal(k_x, (batch, inch), jnp.float32)

    # Config 1: norm=None, act=LeakyReLU(0.2)  (common StyleGAN2 usage), fp32.
    mod1 = LinearELRJax(inch, outch, k_m1, lrmult=1.0, norm=None,
                        act_negative_slope=0.2)
    out1 = jax.block_until_ready(mod1(x))
    ref1 = _reference(x, mod1.weight, mod1.bias, mod1.weightgain,
                      mod1.norm, mod1.act_negative_slope)
    assert out1.shape == (batch, outch)
    assert jnp.allclose(out1.astype(jnp.float32), ref1, atol=1e-4, rtol=1e-4)

    # Config 2: norm='demod', no activation (addmm alpha=weightgain path).
    mod2 = LinearELRJax(inch, outch, k_m2, lrmult=1.0, norm="demod",
                        act_negative_slope=None)
    out2 = jax.block_until_ready(mod2(x))
    ref2 = _reference(x, mod2.weight, mod2.bias, mod2.weightgain,
                      mod2.norm, mod2.act_negative_slope)
    assert out2.shape == (batch, outch)
    assert jnp.allclose(out2.astype(jnp.float32), ref2, atol=1e-4, rtol=1e-4)

    # Config 3: multi-step K accumulation + M padding + 2 parallel N blocks
    # (M=20 -> Mp=24, N=200 -> Np=256 split as 2x128, K=256 split as 2x128).
    M3, K3, N3 = 20, 256, 200
    x3 = jax.random.normal(k_x3, (M3, K3), jnp.float32)
    mod3 = LinearELRJax(K3, N3, k_m3, lrmult=2.0, norm="demod",
                        act_negative_slope=0.1)
    out3 = jax.block_until_ready(mod3(x3, max_tk=128))
    ref3 = _reference(x3, mod3.weight, mod3.bias, mod3.weightgain,
                      mod3.norm, mod3.act_negative_slope)
    assert out3.shape == (M3, N3)
    assert jnp.allclose(out3.astype(jnp.float32), ref3, atol=1e-3, rtol=1e-3)

    # Config 4: bf16 params + activations (MXU-friendly dtype; exercises the
    # fp32-scratch accumulator path and the 16-row sublane alignment).
    x4 = jax.random.normal(k_x4, (batch, inch), jnp.float32).astype(jnp.bfloat16)
    mod4 = LinearELRJax(inch, outch, k_m4, lrmult=1.0, norm=None,
                        act_negative_slope=0.2, param_dtype=jnp.bfloat16)
    out4 = jax.block_until_ready(mod4(x4))
    ref4 = _reference(x4, mod4.weight_p[:outch, :inch], mod4.bias,
                      mod4.weightgain, None, 0.2)
    assert out4.shape == (batch, outch)
    assert jnp.allclose(out4.astype(jnp.float32), ref4, atol=5e-2, rtol=5e-2)

    print("KERNEL_OK")
</pallas_src>

<mosaic_0001>
module attributes {stable_mosaic.version = 11 : i64} {
  func.func @kernel(%arg0: i32, %arg1: i32, %arg2: i32, %arg3: memref<8x128xf32, #tpu.memory_space<vmem>>, %arg4: memref<128x128xf32, #tpu.memory_space<vmem>>, %arg5: memref<1x128xf32, #tpu.memory_space<vmem>>, %arg6: memref<1x128xf32, #tpu.memory_space<vmem>>, %arg7: memref<8x128xf32, #tpu.memory_space<vmem>>) attributes {dimension_semantics = [#tpu.dimension_semantics<parallel>, #tpu.dimension_semantics<parallel>, #tpu.dimension_semantics<arbitrary>], iteration_bounds = array<i64: 1, 1, 1>, scalar_prefetch = 0 : i64, scratch_operands = 0 : i64, tpu.core_type = #tpu.core_type<tc>, window_params = [{transform_indices = @transform_0, window_bounds = array<i64: 8, 128>}, {transform_indices = @transform_1, window_bounds = array<i64: 128, 128>}, {transform_indices = @transform_2, window_bounds = array<i64: 1, 128>}, {transform_indices = @transform_3, window_bounds = array<i64: 1, 128>}, {transform_indices = @transform_4, window_bounds = array<i64: 8, 128>}]} {
    %c0_i32 = arith.constant 0 : i32
    %0 = arith.cmpi eq, %arg2, %c0_i32 : i32
    %1 = arith.extui %0 : i1 to i32
    %c0_i32_0 = arith.constant 0 : i32
    %2 = arith.cmpi ne, %1, %c0_i32_0 : i32
    scf.if %2 {
      %cst_10 = arith.constant 0.000000e+00 : f32
      %12 = vector.broadcast %cst_10 : f32 to vector<8x128xf32>
      %c0_11 = arith.constant 0 : index
      %c0_12 = arith.constant 0 : index
      %13 = vector.load %arg7[%c0_11, %c0_12] : memref<8x128xf32, #tpu.memory_space<vmem>>, vector<8x128xf32>
      tpu.vector_store %arg7[%c0_11, %c0_12], %12 {strides = array<i32>} : memref<8x128xf32, #tpu.memory_space<vmem>>, vector<8x128xf32>,
    } else {
    }
    %c0 = arith.constant 0 : index
    %c0_1 = arith.constant 0 : index
    %3 = vector.load %arg7[%c0, %c0_1] : memref<8x128xf32, #tpu.memory_space<vmem>>, vector<8x128xf32>
    %c0_2 = arith.constant 0 : index
    %c0_3 = arith.constant 0 : index
    %4 = vector.load %arg3[%c0_2, %c0_3] : memref<8x128xf32, #tpu.memory_space<vmem>>, vector<8x128xf32>
    %c0_4 = arith.constant 0 : index
    %c0_5 = arith.constant 0 : index
    %5 = vector.load %arg4[%c0_4, %c0_5] : memref<128x128xf32, #tpu.memory_space<vmem>>, vector<128x128xf32>
    %cst = arith.constant dense<0.000000e+00> : vector<8x128xf32>
    %6 = tpu.matmul %4, %5, %cst {dimension_numbers = #tpu.dot_dimension_numbers<[1], [1], [0], [0], [0, 0, 1, 0], [], []>} : vector<8x128xf32>, vector<128x128xf32>, vector<8x128xf32> -> vector<8x128xf32>
    %7 = arith.addf %3, %6 : vector<8x128xf32>
    %c0_6 = arith.constant 0 : index
    %c0_7 = arith.constant 0 : index
    %8 = vector.load %arg7[%c0_6, %c0_7] : memref<8x128xf32, #tpu.memory_space<vmem>>, vector<8x128xf32>
    tpu.vector_store %arg7[%c0_6, %c0_7], %7 {strides = array<i32>} : memref<8x128xf32, #tpu.memory_space<vmem>>, vector<8x128xf32>,
    %c0_i32_8 = arith.constant 0 : i32
    %9 = arith.cmpi eq, %arg2, %c0_i32_8 : i32
    %10 = arith.extui %9 : i1 to i32
    %c0_i32_9 = arith.constant 0 : i32
    %11 = arith.cmpi ne, %10, %c0_i32_9 : i32
    scf.if %11 {
      %c0_10 = arith.constant 0 : index
      %c0_11 = arith.constant 0 : index
      %12 = vector.load %arg7[%c0_10, %c0_11] : memref<8x128xf32, #tpu.memory_space<vmem>>, vector<8x128xf32>
      %c0_12 = arith.constant 0 : index
      %c0_13 = arith.constant 0 : index
      %13 = vector.load %arg5[%c0_12, %c0_13] : memref<1x128xf32, #tpu.memory_space<vmem>>, vector<1x128xf32>
      %14 = vector.broadcast %13 : vector<1x128xf32> to vector<8x128xf32>
      %15 = arith.mulf %12, %14 : vector<8x128xf32>
      %c0_14 = arith.constant 0 : index
      %c0_15 = arith.constant 0 : index
      %16 = vector.load %arg6[%c0_14, %c0_15] : memref<1x128xf32, #tpu.memory_space<vmem>>, vector<1x128xf32>
      %17 = vector.broadcast %16 : vector<1x128xf32> to vector<8x128xf32>
      %18 = arith.addf %15, %17 : vector<8x128xf32>
      %cst_16 = arith.constant 0.000000e+00 : f32
      %19 = vector.broadcast %cst_16 : f32 to vector<8x128xf32>
      %20 = arith.cmpf oge, %18, %19 : vector<8x128xf32>
      %cst_17 = arith.constant 2.000000e-01 : f32
      %21 = vector.broadcast %cst_17 : f32 to vector<8x128xf32>
      %22 = arith.mulf %18, %21 : vector<8x128xf32>
      %23 = arith.select %20, %18, %22 : vector<8x128xi1>, vector<8x128xf32>
      %c0_18 = arith.constant 0 : index
      %c0_19 = arith.constant 0 : index
      %24 = vector.load %arg7[%c0_18, %c0_19] : memref<8x128xf32, #tpu.memory_space<vmem>>, vector<8x128xf32>
      tpu.vector_store %arg7[%c0_18, %c0_19], %23 {strides = array<i32>} : memref<8x128xf32, #tpu.memory_space<vmem>>, vector<8x128xf32>,
    } else {
    }
    return
  }
  func.func @transform_0(%arg0: i32, %arg1: i32, %arg2: i32) -> (i32, i32) {
    %c0_i32 = arith.constant 0 : i32
    return %arg0, %arg2 : i32, i32
  }
  func.func @transform_1(%arg0: i32, %arg1: i32, %arg2: i32) -> (i32, i32) {
    %c0_i32 = arith.constant 0 : i32
    return %arg1, %arg2 : i32, i32
  }
  func.func @transform_2(%arg0: i32, %arg1: i32, %arg2: i32) -> (i32, i32) {
    %c0_i32 = arith.constant 0 : i32
    %c0_i32_0 = arith.constant 0 : i32
    return %c0_i32, %arg1 : i32, i32
  }
  func.func @transform_3(%arg0: i32, %arg1: i32, %arg2: i32) -> (i32, i32) {
    %c0_i32 = arith.constant 0 : i32
    %c0_i32_0 = arith.constant 0 : i32
    return %c0_i32, %arg1 : i32, i32
  }
  func.func @transform_4(%arg0: i32, %arg1: i32, %arg2: i32) -> (i32, i32) {
    %c0_i32 = arith.constant 0 : i32
    return %arg0, %arg1 : i32, i32
  }
}

</mosaic_0001>

<llo_original>
// kernel: tpu_custom_call.1
$region0: #{tpu_custom_call.1}
  #allocation0 [shape = 'u32[]', space=smem, size = 0x4, offset = 0x4, fixed_abs, tag = 'smem constant byte address 0x4 - core index']
  #allocation1 [shape = 'u32[72,128]{1,0:T(1,128)}', space=vmem, size = 0x9000, scoped, tag = 'internal scratch']
  %s0 = inlined_call_operand.hbm [shape: f32[8,128], index: 0, kind: input, shape index: {}]
  %s1 = inlined_call_operand.hbm [shape: f32[128,128], index: 1, kind: input, shape index: {}]
  %s2 = inlined_call_operand.vmem [shape: f32[1,128], index: 2, kind: input, shape index: {}]
  %s3 = inlined_call_operand.vmem [shape: f32[1,128], index: 3, kind: input, shape index: {}]
  %s4 = inlined_call_operand.hbm [shape: f32[8,128], index: 4, kind: output, shape index: {}]
  %s5 = sld [smem:[#allocation0]]
  $region42: #{tpu_custom_call.1} parent=0
    _
  %s7 = ssub.s32 1, %s5
  %s8 = scalar_select 0, %s7, %s5
  $region1: #{tpu_custom_call.1} parent=0
    #allocation2 [shape = 'u8[4096]{0}', space=vmem, size = 0x1000, scoped, tag = 'input window, operand 0, single buffered']
    #allocation3 [shape = 's32[1]{0}', space=sflag, size = 0x4, scoped, tag = 'scoped memory for tpu_custom_call.1']
    #allocation4 [shape = 's32[1]{0}', space=sflag, size = 0x4, scoped, tag = 'scoped memory for tpu_custom_call.1']
    #allocation5 [shape = 'u8[65536]{0}', space=vmem, size = 0x10000, scoped, tag = 'input window, operand 1, single buffered']
    #allocation6 [shape = 's32[1]{0}', space=sflag, size = 0x4, scoped, tag = 'scoped memory for tpu_custom_call.1']
    #allocation7 [shape = 'u8[4096]{0}', space=vmem, size = 0x1000, scoped, tag = 'output window, operand 0, single buffered']
    %9 = vsyncpa [#allocation3], 0
    %10 = vsyncpa [#allocation6], 0
    %11 = vsyncpa [#allocation4], 0
    // Predicated region
    $region2: #{tpu_custom_call.1} parent=1 // pred_check
      _
    $region3: #{tpu_custom_call.1} parent=1 // pred_check_branch
      %13 = sbr.rel (0) target = $region5
    $region4: #{tpu_custom_call.1} parent=1 // pred_region
      %15 = vsyncadd [#allocation3], 0
      %s17 = sshll.u32 %s0, 4
      %s18 = int_to_ptr.hbm [resolvable:$true] %s17
      %s19 = sshll.u32 [#allocation2], 4
      %s20 = int_to_ptr.vmem [resolvable:$true] %s19
      %22 = dma.hbm_to_vmem [thread:$0]  %s18, 128, %s20, [#allocation3]
    $region5: #{tpu_custom_call.1} parent=1 // pred_fallthru
      _
    // Predicated region
    $region6: #{tpu_custom_call.1} parent=1 // pred_check
      _
    $region7: #{tpu_custom_call.1} parent=1 // pred_check_branch
      %24 = sbr.rel (0) target = $region9
    $region8: #{tpu_custom_call.1} parent=1 // pred_region
      %26 = vsyncadd [#allocation6], 0
      %s27 = sshll.u32 %s1, 4
      %s28 = int_to_ptr.hbm [resolvable:$true] %s27
      %s29 = sshll.u32 [#allocation5], 4
      %s30 = int_to_ptr.vmem [resolvable:$true] %s29
      %35 = dma.hbm_to_vmem [thread:$0]  %s28, 2048, %s30, [#allocation6], 128, 128, 8
    $region9: #{tpu_custom_call.1} parent=1 // pred_fallthru
      _
    // Predicated region
    $region10: #{tpu_custom_call.1} parent=1 // pred_check
      _
    $region11: #{tpu_custom_call.1} parent=1 // pred_check_branch
      %37 = sbr.rel (0) target = $region13
    $region12: #{tpu_custom_call.1} parent=1 // pred_region
      _
    $region13: #{tpu_custom_call.1} parent=1 // pred_fallthru
      _
    // Predicated region
    $region14: #{tpu_custom_call.1} parent=1 // pred_check
      _
    $region15: #{tpu_custom_call.1} parent=1 // pred_check_branch
      %39 = sbr.rel (0) target = $region17
    $region16: #{tpu_custom_call.1} parent=1 // pred_region
      _
    $region17: #{tpu_custom_call.1} parent=1 // pred_fallthru
      _
    // Predicated region
    $region18: #{tpu_custom_call.1} parent=1 // pred_check
      _
    $region19: #{tpu_custom_call.1} parent=1 // pred_check_branch
      %41 = sbr.rel (0) target = $region21
    $region20: #{tpu_custom_call.1} parent=1 // pred_region
      %43 = dma.done [#allocation3], 128
    $region21: #{tpu_custom_call.1} parent=1 // pred_fallthru
      _
    // Predicated region
    $region22: #{tpu_custom_call.1} parent=1 // pred_check
      _
    $region23: #{tpu_custom_call.1} parent=1 // pred_check_branch
      %45 = sbr.rel (0) target = $region25
    $region24: #{tpu_custom_call.1} parent=1 // pred_region
      %47 = dma.done [#allocation6], 2048
    $region25: #{tpu_custom_call.1} parent=1 // pred_fallthru
      _
    %p48 = scmp.eq.s32.totalorder 0, 0
    // Predicated region
    $region26: #{tpu_custom_call.1} parent=1 // pred_check
      %p49 = pneg %p48
    $region27: #{tpu_custom_call.1} parent=1 // pred_check_branch
      %51 = sbr.rel (%p49) target = $region29
    $region28: #{tpu_custom_call.1} parent=1 // pred_region
      %52 = vst [vmem:[#allocation7] sm:$0xff] 0.0
    $region29: #{tpu_custom_call.1} parent=1 // pred_fallthru
      _
    %v53 = vld [vmem:[#allocation7] sm:$0xff]
    %v54 = vld [vmem:[#allocation2] sm:$0xff]
    %v55 = vld [vmem:[#allocation5] sm:$0xff]
    %v56 = vld [vmem:[#allocation5 + $0x8] sm:$0xff]
    %v57 = vld [vmem:[#allocation5 + $0x10] sm:$0xff]
    %v58 = vld [vmem:[#allocation5 + $0x18] sm:$0xff]
    %v59 = vld [vmem:[#allocation5 + $0x20] sm:$0xff]
    %v60 = vld [vmem:[#allocation5 + $0x28] sm:$0xff]
    %v61 = vld [vmem:[#allocation5 + $0x30] sm:$0xff]
    %v62 = vld [vmem:[#allocation5 + $0x38] sm:$0xff]
    %v63 = vld [vmem:[#allocation5 + $0x40] sm:$0xff]
    %v64 = vld [vmem:[#allocation5 + $0x48] sm:$0xff]
    %v65 = vld [vmem:[#allocation5 + $0x50] sm:$0xff]
    %v66 = vld [vmem:[#allocation5 + $0x58] sm:$0xff]
    %v67 = vld [vmem:[#allocation5 + $0x60] sm:$0xff]
    %v68 = vld [vmem:[#allocation5 + $0x68] sm:$0xff]
    %v69 = vld [vmem:[#allocation5 + $0x70] sm:$0xff]
    %v70 = vld [vmem:[#allocation5 + $0x78] sm:$0xff]
    %71 = vmatpush.xpose.msra.mxu0 %v70
    %72 = vmatpush.xpose.msra.mxu0 %v69
    %73 = vmatpush.xpose.msra.mxu0 %v68
    %74 = vmatpush.xpose.msra.mxu0 %v67
    %75 = vmatpush.xpose.msra.mxu0 %v66
    %76 = vmatpush.xpose.msra.mxu0 %v65
    %77 = vmatpush.xpose.msra.mxu0 %v64
    %78 = vmatpush.xpose.msra.mxu0 %v63
    %79 = vmatpush.xpose.msra.mxu0 %v62
    %80 = vmatpush.xpose.msra.mxu0 %v61
    %81 = vmatpush.xpose.msra.mxu0 %v60
    %82 = vmatpush.xpose.msra.mxu0 %v59
    %83 = vmatpush.xpose.msra.mxu0 %v58
    %84 = vmatpush.xpose.msra.mxu0 %v57
    %85 = vmatpush.xpose.msra.mxu0 %v56
    %86 = vmatpush.xpose.msra.mxu0 %v55
    %87 = vmatmul.f32.gmra.mxu0 %v54
    %v88 = vpop.f32.mrf.mxu0
    %v89 = vadd.f32 0.0, %v88
    %90 = vdwg.mxu0
    %v91 = vadd.f32 %v53, %v89
    %92 = vst [vmem:[#allocation7] sm:$0xff] %v91
    // Predicated region
    $region30: #{tpu_custom_call.1} parent=1 // pred_check
      %p93 = pneg %p48
    $region31: #{tpu_custom_call.1} parent=1 // pred_check_branch
      %95 = sbr.rel (%p93) target = $region33
    $region32: #{tpu_custom_call.1} parent=1 // pred_region
      %v96 = vld [vmem:[#allocation7] sm:$0xff]
      %v97 = vld [vmem:[%s2] sm:$0x1]
      %v99 = vperm.slane %v97, 0
      %v101 = vmul.f32 %v96, %v99
      %v102 = vld [vmem:[%s3] sm:$0x1]
      %v104 = vperm.slane %v102, 0
      %v106 = vadd.f32 %v101, %v104
      %vm107 = vcmp.ge.f32.partialorder %v106, 0.0
      %v108 = vmul.f32 %v106, 0.2
      %v109 = vsel %vm107, %v106, %v108
      %110 = vst [vmem:[#allocation7] sm:$0xff] %v109
    $region33: #{tpu_custom_call.1} parent=1 // pred_fallthru
      _
    // Predicated region
    $region34: #{tpu_custom_call.1} parent=1 // pred_check
      _
    $region35: #{tpu_custom_call.1} parent=1 // pred_check_branch
      %112 = sbr.rel (0) target = $region37
    $region36: #{tpu_custom_call.1} parent=1 // pred_region
      %114 = vsyncadd [#allocation4], 0
      %s116 = sshll.u32 [#allocation7], 4
      %s117 = int_to_ptr.vmem [resolvable:$true] %s116
      %s118 = sshll.u32 %s4, 4
      %s119 = int_to_ptr.hbm [resolvable:$true] %s118
      %121 = dma.vmem_to_hbm [thread:$0]  %s117, 128, %s119, [#allocation4]
    $region37: #{tpu_custom_call.1} parent=1 // pred_fallthru
      _
    // Predicated region
    $region38: #{tpu_custom_call.1} parent=1 // pred_check
      _
    $region39: #{tpu_custom_call.1} parent=1 // pred_check_branch
      %123 = sbr.rel (0) target = $region41
    $region40: #{tpu_custom_call.1} parent=1 // pred_region
      %125 = dma.done [#allocation4], 128
    $region41: #{tpu_custom_call.1} parent=1 // pred_fallthru
      _
    %126 = vsyncpa [#allocation3], 1
    %127 = vsyncpa [#allocation6], 1
    %128 = vsyncpa [#allocation4], 1

</llo_original>
